<compile_context>
chip_gen: v7x
topology: tpu7x:2x2x1
jax: 0.10.0
libtpu: 0.0.40
codegen_flags: <defaults>
</compile_context>

<pallas_src>
import functools
import math

import jax
import jax.numpy as jnp
from jax import lax
from jax.experimental import pallas as pl
from jax.experimental.pallas import tpu as pltpu


# ---------------------------------------------------------------------------
# Tiled linear: o = x @ w + b, with a K-reduction grid axis + f32 accumulator.
# ---------------------------------------------------------------------------
def linear_bias_kernel(x_ref, w_ref, b_ref, o_ref, acc_ref):
    k = pl.program_id(2)

    @pl.when(k == 0)
    def _init():
        acc_ref[...] = jnp.zeros_like(acc_ref)

    acc_ref[...] += jnp.dot(x_ref[...], w_ref[...],
                            preferred_element_type=jnp.float32)

    @pl.when(k == pl.num_programs(2) - 1)
    def _finalize():
        o_ref[...] = (acc_ref[...] + b_ref[...].astype(jnp.float32)
                      ).astype(o_ref.dtype)


def _pick_tile(dim, target, align):
    """Largest tile <= target that evenly divides `dim` (multiple of `align`);
    falls back to the full dim (grid size 1 on that axis) if none exists."""
    if dim <= target:
        return dim
    t = (target // align) * align
    while t >= align:
        if dim % t == 0:
            return t
        t -= align
    return dim


def pallas_linear(x2d, w, b, out_dtype, *, tm=256, tn=256, tk=512):
    """x2d:[T,K] (bf16), w:[K,N] (bf16), b:[1,N] (f32) -> [T,N] out_dtype."""
    T, K = x2d.shape
    Kw, N = w.shape
    assert K == Kw
    tm = _pick_tile(T, tm, 8)
    tn = _pick_tile(N, tn, 128)
    tk = _pick_tile(K, tk, 128)
    grid = (T // tm, N // tn, K // tk)

    bytes_in = T * K * x2d.dtype.itemsize + K * N * w.dtype.itemsize
    bytes_out = T * N * jnp.dtype(out_dtype).itemsize

    return pl.pallas_call(
        linear_bias_kernel,
        out_shape=jax.ShapeDtypeStruct((T, N), out_dtype),
        grid_spec=pltpu.PrefetchScalarGridSpec(
            num_scalar_prefetch=0,
            grid=grid,
            in_specs=[
                pl.BlockSpec((tm, tk), lambda i, j, k: (i, k)),
                pl.BlockSpec((tk, tn), lambda i, j, k: (k, j)),
                pl.BlockSpec((1, tn), lambda i, j, k: (0, j)),
            ],
            out_specs=pl.BlockSpec((tm, tn), lambda i, j, k: (i, j)),
            scratch_shapes=[pltpu.VMEM((tm, tn), jnp.float32)],
        ),
        compiler_params=pltpu.CompilerParams(
            dimension_semantics=("parallel", "parallel", "arbitrary"),
            # Small tiles (<2 MiB live) fit comfortably within v7x's 64 MiB
            # physical VMEM; keep the scoped limit modest on all generations.
            vmem_limit_bytes=32 * 1024 * 1024,
        ),
        cost_estimate=pl.CostEstimate(
            flops=int(2 * T * K * N),
            transcendentals=0,
            bytes_accessed=int(bytes_in + bytes_out),
        ),
    )(x2d, w, b)


# ---------------------------------------------------------------------------
# Multi-head attention: all heads of one batch row per grid step.
# qkv is packed [Q(all heads) | K(all heads) | V(all heads)], head-major, so
# no head-split transposes are ever materialized in HBM.
# ---------------------------------------------------------------------------
def attention_kernel(qkv_ref, mask_ref, o_ref, *, num_heads, head_dim, scale):
    # qkv_ref: [1, S, 3H] bf16; mask_ref: [1, 1, S] f32; o_ref: [1, S, H].
    H = num_heads * head_dim
    qkv = qkv_ref[0]                       # [S, 3H]
    mask = mask_ref[0]                     # [1, S] -> broadcasts over query rows

    ctx_heads = []
    for h in range(num_heads):             # static, small loop over heads
        lo = h * head_dim
        q = qkv[:, lo:lo + head_dim]                    # [S, D] bf16
        k = qkv[:, H + lo:H + lo + head_dim]            # [S, D] bf16
        v = qkv[:, 2 * H + lo:2 * H + lo + head_dim]    # [S, D] bf16

        # q k^T without materializing k.T: contract the D axis of both operands.
        scores = lax.dot_general(
            q, k, dimension_numbers=(((1,), (1,)), ((), ())),
            preferred_element_type=jnp.float32) * scale        # [S, S] f32
        scores = scores + mask                                  # additive key mask

        # Softmax entirely in f32 (v5e VPU/EUP have no bf16 path).
        row_max = jnp.max(scores, axis=-1, keepdims=True)
        p = jnp.exp(scores - row_max)
        denom = jnp.sum(p, axis=-1, keepdims=True)
        p = p * pl.reciprocal(denom, approx=True)               # EUP, ~free

        ctx = jnp.dot(p.astype(qkv.dtype), v,
                      preferred_element_type=jnp.float32)       # [S, D] f32
        ctx_heads.append(ctx)

    # Lane-dense store: the whole [S, H] slab for this batch row at once.
    o_ref[0] = jnp.concatenate(ctx_heads, axis=-1).astype(o_ref.dtype)


def pallas_attention(qkv_bsh, mask_b1s, num_heads, head_dim, out_dtype):
    B, S, threeH = qkv_bsh.shape
    H = num_heads * head_dim
    kern = functools.partial(attention_kernel, num_heads=num_heads,
                             head_dim=head_dim, scale=1.0 / math.sqrt(head_dim))
    return pl.pallas_call(
        kern,
        out_shape=jax.ShapeDtypeStruct((B, S, H), out_dtype),
        grid=(B,),
        in_specs=[
            pl.BlockSpec((1, S, threeH), lambda b: (b, 0, 0)),
            pl.BlockSpec((1, 1, S), lambda b: (b, 0, 0)),
        ],
        out_specs=pl.BlockSpec((1, S, H), lambda b: (b, 0, 0)),
        compiler_params=pltpu.CompilerParams(
            dimension_semantics=("parallel",),
            vmem_limit_bytes=32 * 1024 * 1024,
        ),
        cost_estimate=pl.CostEstimate(
            flops=int(4 * B * num_heads * S * S * head_dim),
            transcendentals=int(B * num_heads * S * S),
            bytes_accessed=int(qkv_bsh.size * qkv_bsh.dtype.itemsize
                               + B * S * H * jnp.dtype(out_dtype).itemsize),
        ),
    )(qkv_bsh, mask_b1s)


# ---------------------------------------------------------------------------
# AttentionComponent forward
# ---------------------------------------------------------------------------
def attention_component_forward(hidden_states, attention_mask, params, num_heads):
    """hidden_states: [B,S,H] f32; attention_mask: [B,S] additive f32 or None."""
    B, S, H = hidden_states.shape
    D = H // num_heads
    compute_dtype = jnp.bfloat16            # MXU operand dtype; f32 accumulation

    x2d = hidden_states.astype(compute_dtype).reshape(B * S, H)

    # Fused QKV projection; bf16 intermediate halves its HBM round trip.
    qkv = pallas_linear(x2d, params["wqkv"].astype(compute_dtype),
                        params["bqkv"], out_dtype=compute_dtype)      # [B*S, 3H]
    qkv = qkv.reshape(B, S, 3 * H)          # free reshape, no transposes

    if attention_mask is None:
        attention_mask = jnp.zeros((B, S), jnp.float32)
    mask_b1s = attention_mask.astype(jnp.float32).reshape(B, 1, S)

    # Scaled-dot-product attention; output already merged-head [B, S, H].
    ctx = pallas_attention(qkv, mask_b1s, num_heads, D, out_dtype=compute_dtype)

    # Output dense projection (`self.dense`), back to the caller's dtype.
    out = pallas_linear(ctx.reshape(B * S, H),
                        params["wo"].astype(compute_dtype),
                        params["bo"], out_dtype=hidden_states.dtype)  # [B*S, H]
    return out.reshape(B, S, H)


# ---------------------------------------------------------------------------
# Pure-JAX reference (matmul_dtype=bfloat16 mirrors the kernel's bf16 casts so
# the comparison stays tight).
# ---------------------------------------------------------------------------
def reference_forward(hidden_states, attention_mask, params, num_heads,
                      matmul_dtype=jnp.float32):
    B, S, H = hidden_states.shape
    D = H // num_heads
    md = matmul_dtype

    def mm(a, bmat):
        return jnp.dot(a.astype(md), bmat.astype(md),
                       preferred_element_type=jnp.float32)

    qkv = mm(hidden_states.reshape(B * S, H), params["wqkv"]) + params["bqkv"]
    qkv = qkv.astype(md).astype(jnp.float32)          # bf16 intermediate
    qkv = qkv.reshape(B, S, 3, num_heads, D)
    q = jnp.transpose(qkv[:, :, 0], (0, 2, 1, 3))
    k = jnp.transpose(qkv[:, :, 1], (0, 2, 1, 3))
    v = jnp.transpose(qkv[:, :, 2], (0, 2, 1, 3))
    scores = jnp.einsum("bhqd,bhkd->bhqk", q.astype(md), k.astype(md),
                        preferred_element_type=jnp.float32) / math.sqrt(D)
    if attention_mask is not None:
        scores = scores + attention_mask[:, None, None, :]
    p = jax.nn.softmax(scores, axis=-1)
    ctx = jnp.einsum("bhqk,bhkd->bhqd", p.astype(md), v.astype(md),
                     preferred_element_type=jnp.float32)
    ctx = jnp.transpose(ctx, (0, 2, 1, 3)).reshape(B * S, H)
    ctx = ctx.astype(md).astype(jnp.float32)          # bf16 intermediate
    out = mm(ctx, params["wo"]) + params["bo"]
    return out.reshape(B, S, H).astype(hidden_states.dtype)


def init_params(key, hidden_size):
    k1, k2, k3, k4 = jax.random.split(key, 4)
    std = 0.02
    return {
        # weights stored [in, out] (transposed vs. torch.nn.Linear storage)
        "wqkv": jax.random.normal(k1, (hidden_size, 3 * hidden_size), jnp.float32) * std,
        "bqkv": jax.random.normal(k2, (1, 3 * hidden_size), jnp.float32) * std,
        "wo": jax.random.normal(k3, (hidden_size, hidden_size), jnp.float32) * std,
        "bo": jax.random.normal(k4, (1, hidden_size), jnp.float32) * std,
    }


if __name__ == "__main__":
    B, S, H, NUM_HEADS = 2, 8, 32, 4

    root = jax.random.PRNGKey(0)
    k_x, k_params = jax.random.split(root)

    hidden_states = jax.random.normal(k_x, (B, S, H), jnp.float32)
    # additive mask: last two key positions of batch 1 are masked out
    attention_mask = jnp.zeros((B, S), jnp.float32).at[1, -2:].set(-1e4)

    params = init_params(k_params, H)

    out = attention_component_forward(hidden_states, attention_mask, params, NUM_HEADS)
    out = jax.block_until_ready(out)

    ref = reference_forward(hidden_states, attention_mask, params, NUM_HEADS,
                            matmul_dtype=jnp.bfloat16)
    assert out.shape == (B, S, H)
    assert jnp.allclose(out, ref, atol=5e-3, rtol=5e-2), \
        "Pallas output mismatch vs reference"

    print("KERNEL_OK")
</pallas_src>

<mosaic_0001>
module attributes {stable_mosaic.version = 11 : i64} {
  func.func @linear_bias_kernel(%arg0: i32, %arg1: i32, %arg2: i32, %arg3: memref<16x32xbf16, #tpu.memory_space<vmem>>, %arg4: memref<32x96xbf16, #tpu.memory_space<vmem>>, %arg5: memref<1x96xf32, #tpu.memory_space<vmem>>, %arg6: memref<16x96xbf16, #tpu.memory_space<vmem>>, %arg7: memref<16x96xf32, #tpu.memory_space<vmem>>) attributes {dimension_semantics = [#tpu.dimension_semantics<parallel>, #tpu.dimension_semantics<parallel>, #tpu.dimension_semantics<arbitrary>], iteration_bounds = array<i64: 1, 1, 1>, scalar_prefetch = 0 : i64, scratch_operands = 1 : i64, tpu.core_type = #tpu.core_type<tc>, window_params = [{transform_indices = @transform_0, window_bounds = array<i64: 16, 32>}, {transform_indices = @transform_1, window_bounds = array<i64: 32, 96>}, {transform_indices = @transform_2, window_bounds = array<i64: 1, 96>}, {transform_indices = @transform_3, window_bounds = array<i64: 16, 96>}]} {
    %c0_i32 = arith.constant 0 : i32
    %0 = arith.cmpi eq, %arg2, %c0_i32 : i32
    %1 = arith.extui %0 : i1 to i32
    %c0_i32_0 = arith.constant 0 : i32
    %2 = arith.cmpi ne, %1, %c0_i32_0 : i32
    scf.if %2 {
      %cst_10 = arith.constant 0.000000e+00 : f32
      %12 = vector.broadcast %cst_10 : f32 to vector<16x96xf32>
      %c0_11 = arith.constant 0 : index
      %c0_12 = arith.constant 0 : index
      %13 = vector.load %arg7[%c0_11, %c0_12] : memref<16x96xf32, #tpu.memory_space<vmem>>, vector<16x96xf32>
      tpu.vector_store %arg7[%c0_11, %c0_12], %12 {strides = array<i32>} : memref<16x96xf32, #tpu.memory_space<vmem>>, vector<16x96xf32>,
    } else {
    }
    %c0 = arith.constant 0 : index
    %c0_1 = arith.constant 0 : index
    %3 = vector.load %arg7[%c0, %c0_1] : memref<16x96xf32, #tpu.memory_space<vmem>>, vector<16x96xf32>
    %c0_2 = arith.constant 0 : index
    %c0_3 = arith.constant 0 : index
    %4 = vector.load %arg3[%c0_2, %c0_3] : memref<16x32xbf16, #tpu.memory_space<vmem>>, vector<16x32xbf16>
    %c0_4 = arith.constant 0 : index
    %c0_5 = arith.constant 0 : index
    %5 = vector.load %arg4[%c0_4, %c0_5] : memref<32x96xbf16, #tpu.memory_space<vmem>>, vector<32x96xbf16>
    %cst = arith.constant dense<0.000000e+00> : vector<16x96xf32>
    %6 = tpu.matmul %4, %5, %cst {dimension_numbers = #tpu.dot_dimension_numbers<[1], [0], [0], [1], [0, 0, 1, 1], [], []>} : vector<16x32xbf16>, vector<32x96xbf16>, vector<16x96xf32> -> vector<16x96xf32>
    %7 = arith.addf %3, %6 : vector<16x96xf32>
    %c0_6 = arith.constant 0 : index
    %c0_7 = arith.constant 0 : index
    %8 = vector.load %arg7[%c0_6, %c0_7] : memref<16x96xf32, #tpu.memory_space<vmem>>, vector<16x96xf32>
    tpu.vector_store %arg7[%c0_6, %c0_7], %7 {strides = array<i32>} : memref<16x96xf32, #tpu.memory_space<vmem>>, vector<16x96xf32>,
    %c0_i32_8 = arith.constant 0 : i32
    %9 = arith.cmpi eq, %arg2, %c0_i32_8 : i32
    %10 = arith.extui %9 : i1 to i32
    %c0_i32_9 = arith.constant 0 : i32
    %11 = arith.cmpi ne, %10, %c0_i32_9 : i32
    scf.if %11 {
      %c0_10 = arith.constant 0 : index
      %c0_11 = arith.constant 0 : index
      %12 = vector.load %arg7[%c0_10, %c0_11] : memref<16x96xf32, #tpu.memory_space<vmem>>, vector<16x96xf32>
      %c0_12 = arith.constant 0 : index
      %c0_13 = arith.constant 0 : index
      %13 = vector.load %arg5[%c0_12, %c0_13] : memref<1x96xf32, #tpu.memory_space<vmem>>, vector<1x96xf32>
      %14 = vector.broadcast %13 : vector<1x96xf32> to vector<16x96xf32>
      %15 = arith.addf %12, %14 : vector<16x96xf32>
      %16 = arith.truncf %15 : vector<16x96xf32> to vector<16x96xbf16>
      %c0_14 = arith.constant 0 : index
      %c0_15 = arith.constant 0 : index
      %17 = vector.load %arg6[%c0_14, %c0_15] : memref<16x96xbf16, #tpu.memory_space<vmem>>, vector<16x96xbf16>
      tpu.vector_store %arg6[%c0_14, %c0_15], %16 {strides = array<i32>} : memref<16x96xbf16, #tpu.memory_space<vmem>>, vector<16x96xbf16>,
    } else {
    }
    return
  }
  func.func @transform_0(%arg0: i32, %arg1: i32, %arg2: i32) -> (i32, i32) {
    %c0_i32 = arith.constant 0 : i32
    return %arg0, %arg2 : i32, i32
  }
  func.func @transform_1(%arg0: i32, %arg1: i32, %arg2: i32) -> (i32, i32) {
    %c0_i32 = arith.constant 0 : i32
    return %arg2, %arg1 : i32, i32
  }
  func.func @transform_2(%arg0: i32, %arg1: i32, %arg2: i32) -> (i32, i32) {
    %c0_i32 = arith.constant 0 : i32
    %c0_i32_0 = arith.constant 0 : i32
    return %c0_i32, %arg1 : i32, i32
  }
  func.func @transform_3(%arg0: i32, %arg1: i32, %arg2: i32) -> (i32, i32) {
    %c0_i32 = arith.constant 0 : i32
    return %arg0, %arg1 : i32, i32
  }
}

</mosaic_0001>

<llo_original>
// kernel: tpu_custom_call.1
$region0: #{tpu_custom_call.1}
  #allocation0 [shape = 'u32[]', space=smem, size = 0x4, offset = 0x4, fixed_abs, tag = 'smem constant byte address 0x4 - core index']
  #allocation1 [shape = 'u32[144,128]{1,0:T(1,128)}', space=vmem, size = 0x12000, scoped, tag = 'internal scratch']
  #allocation2 [shape = 'f32[16,96]{1,0:T(8,128)}', space=vmem, size = 0x2000, scoped, tag = 'scratch operand']
  %s0 = inlined_call_operand.hbm [shape: bf16[16,32], index: 0, kind: input, shape index: {}]
  %s1 = inlined_call_operand.hbm [shape: bf16[32,96], index: 1, kind: input, shape index: {}]
  %s2 = inlined_call_operand.vmem [shape: f32[1,96], index: 2, kind: input, shape index: {}]
  %s3 = inlined_call_operand.hbm [shape: bf16[16,96], index: 3, kind: output, shape index: {}]
  %s4 = sld [smem:[#allocation0]]
  $region38: #{tpu_custom_call.1} parent=0
    _
  %s6 = ssub.s32 1, %s4
  %s7 = scalar_select 0, %s6, %s4
  $region1: #{tpu_custom_call.1} parent=0
    #allocation3 [shape = 'u8[4096]{0}', space=vmem, size = 0x1000, scoped, tag = 'input window, operand 0, single buffered']
    #allocation4 [shape = 's32[1]{0}', space=sflag, size = 0x4, scoped, tag = 'scoped memory for tpu_custom_call.1']
    #allocation5 [shape = 's32[1]{0}', space=sflag, size = 0x4, scoped, tag = 'scoped memory for tpu_custom_call.1']
    #allocation6 [shape = 'u8[8192]{0}', space=vmem, size = 0x2000, scoped, tag = 'input window, operand 1, single buffered']
    #allocation7 [shape = 's32[1]{0}', space=sflag, size = 0x4, scoped, tag = 'scoped memory for tpu_custom_call.1']
    #allocation8 [shape = 'u8[4096]{0}', space=vmem, size = 0x1000, scoped, tag = 'output window, operand 0, single buffered']
    %8 = vsyncpa [#allocation4], 0
    %9 = vsyncpa [#allocation7], 0
    %10 = vsyncpa [#allocation5], 0
    // Predicated region
    $region2: #{tpu_custom_call.1} parent=1 // pred_check
      _
    $region3: #{tpu_custom_call.1} parent=1 // pred_check_branch
      %12 = sbr.rel (0) target = $region5
    $region4: #{tpu_custom_call.1} parent=1 // pred_region
      %s14 = ssub.s32 128, 128
      %15 = vsyncadd [#allocation4], %s14
      %s16 = sshll.u32 [#allocation3], 4
      %s17 = int_to_ptr.vmem [resolvable:$true] %s16
      %22 = dma.hbm_to_vmem [thread:$0]  %s0, 128, %s17, [#allocation4], 64, 64, 4
    $region5: #{tpu_custom_call.1} parent=1 // pred_fallthru
      _
    // Predicated region
    $region6: #{tpu_custom_call.1} parent=1 // pred_check
      _
    $region7: #{tpu_custom_call.1} parent=1 // pred_check_branch
      %24 = sbr.rel (0) target = $region9
    $region8: #{tpu_custom_call.1} parent=1 // pred_region
      %s26 = ssub.s32 256, 256
      %27 = vsyncadd [#allocation7], %s26
      %s28 = sshll.u32 [#allocation6], 4
      %s29 = int_to_ptr.vmem [resolvable:$true] %s28
      %34 = dma.hbm_to_vmem [thread:$0]  %s1, 256, %s29, [#allocation7], 64, 64, 4
    $region9: #{tpu_custom_call.1} parent=1 // pred_fallthru
      _
    // Predicated region
    $region10: #{tpu_custom_call.1} parent=1 // pred_check
      _
    $region11: #{tpu_custom_call.1} parent=1 // pred_check_branch
      %36 = sbr.rel (0) target = $region13
    $region12: #{tpu_custom_call.1} parent=1 // pred_region
      _
    $region13: #{tpu_custom_call.1} parent=1 // pred_fallthru
      _
    // Predicated region
    $region14: #{tpu_custom_call.1} parent=1 // pred_check
      _
    $region15: #{tpu_custom_call.1} parent=1 // pred_check_branch
      %38 = sbr.rel (0) target = $region17
    $region16: #{tpu_custom_call.1} parent=1 // pred_region
      %39 = dma.done [#allocation4], 128
    $region17: #{tpu_custom_call.1} parent=1 // pred_fallthru
      _
    // Predicated region
    $region18: #{tpu_custom_call.1} parent=1 // pred_check
      _
    $region19: #{tpu_custom_call.1} parent=1 // pred_check_branch
      %41 = sbr.rel (0) target = $region21
    $region20: #{tpu_custom_call.1} parent=1 // pred_region
      %42 = dma.done [#allocation7], 256
    $region21: #{tpu_custom_call.1} parent=1 // pred_fallthru
      _
    %p44 = scmp.eq.s32.totalorder 0, 0
    // Predicated region
    $region22: #{tpu_custom_call.1} parent=1 // pred_check
      %p45 = pneg %p44
    $region23: #{tpu_custom_call.1} parent=1 // pred_check_branch
      %47 = sbr.rel (%p45) target = $region25
    $region24: #{tpu_custom_call.1} parent=1 // pred_region
      %vm48 = vcmask 785408
      %49 = vst.msk [vmem:[#allocation2] sm:$0xff] %vm48, 0.0
      %50 = vst.msk [vmem:[#allocation2 + $0x8] sm:$0xff] %vm48, 0.0
    $region25: #{tpu_custom_call.1} parent=1 // pred_fallthru
      _
    %v51 = vld [vmem:[#allocation2] sm:$0xff]
    %v52 = vld [vmem:[#allocation2 + $0x8] sm:$0xff]
    %v53 = vld [vmem:[#allocation3] sm:$0xf]
    %v54 = vld [vmem:[#allocation3 + $0x4] sm:$0xf]
    %v55 = vld [vmem:[#allocation6] sm:$0xf]
    %v56 = vld [vmem:[#allocation6 + $0x4] sm:$0xf]
    %v57 = vld [vmem:[#allocation6 + $0x8] sm:$0xf]
    %v58 = vld [vmem:[#allocation6 + $0xc] sm:$0xf]
    %v61 = vunpack.c.l.b16 %v53
    %v62 = vunpack.c.l.b16 %v54
    %v63 = vpack.c.b16 %v62, %v61
    %v68 = vunpack.c.l.b16 %v55
    %v69 = vunpack.c.l.b16 %v56
    %v70 = vunpack.c.l.b16 %v57
    %v71 = vunpack.c.l.b16 %v58
    %v72 = vpack.c.b16 %v69, %v68
    %v73 = vpack.c.b16 %v71, %v70
    %vm76 = vcmask 261120
    %v78 = vsel %vm76, %v63, 0
    %80 = vmatprep.subr.bf16.mxu0 0
    %81 = vmatpush1.bf16.msra.mxu0 %v72
    %82 = vmatprep.subr.bf16.mxu0 0
    %83 = vmatpush1.bf16.msra.mxu0 %v73
    %84 = vmatprep.subr.bf16.mxu0 0
    %85 = vmatpush1.bf16.msra.mxu0 0
    %86 = vmatprep.subr.bf16.mxu0 0
    %87 = vmatpush1.bf16.msra.mxu0 0
    %88 = vmatprep.subr.bf16.mxu0 0
    %89 = vmatpush1.bf16.msra.mxu0 0
    %90 = vmatprep.subr.bf16.mxu0 0
    %91 = vmatpush1.bf16.msra.mxu0 0
    %92 = vmatprep.subr.bf16.mxu0 0
    %93 = vmatpush1.bf16.msra.mxu0 0
    %94 = vmatprep.subr.bf16.mxu0 0
    %95 = vmatpush1.bf16.msra.mxu0 0
    %96 = vmatprep.subr.bf16.mxu0 0
    %97 = vmatpush1.bf16.msra.mxu0 0
    %98 = vmatprep.subr.bf16.mxu0 0
    %99 = vmatpush1.bf16.msra.mxu0 0
    %100 = vmatprep.subr.bf16.mxu0 0
    %101 = vmatpush1.bf16.msra.mxu0 0
    %102 = vmatprep.subr.bf16.mxu0 0
    %103 = vmatpush1.bf16.msra.mxu0 0
    %104 = vmatprep.subr.bf16.mxu0 0
    %105 = vmatpush1.bf16.msra.mxu0 0
    %106 = vmatprep.subr.bf16.mxu0 0
    %107 = vmatpush1.bf16.msra.mxu0 0
    %108 = vmatprep.subr.bf16.mxu0 0
    %109 = vmatpush1.bf16.msra.mxu0 0
    %110 = vmatprep.subr.bf16.mxu0 0
    %111 = vmatpush1.bf16.msra.mxu0 0
    %112 = vmatprep.mubr.bf16.mxu0 0
    %113 = vmatmul.mubr.bf16.gmra.mrb[0].mxu0 %v78
    %v114 = vpop.f32.mrb[0].mxu0
    %v115 = vadd.f32 0.0, %v114
    %v116 = vpop.f32.mrb[0].mxu0
    %v117 = vpop.f32.mrb[0].mxu0
    %v118 = vadd.f32 0.0, %v117
    %v119 = vpop.f32.mrb[0].mxu0
    %120 = vdwg.mxu0
    %v121 = vadd.f32 %v51, %v115
    %v122 = vadd.f32 %v52, %v118
    %vm123 = vcmask 785408
    %124 = vst.msk [vmem:[#allocation2] sm:$0xff] %vm123, %v121
    %125 = vst.msk [vmem:[#allocation2 + $0x8] sm:$0xff] %vm123, %v122
    // Predicated region
    $region26: #{tpu_custom_call.1} parent=1 // pred_check
      %p126 = pneg %p44
    $region27: #{tpu_custom_call.1} parent=1 // pred_check_branch
      %128 = sbr.rel (%p126) target = $region29
    $region28: #{tpu_custom_call.1} parent=1 // pred_region
      %v129 = vld [vmem:[#allocation2] sm:$0xff]
      %v130 = vld [vmem:[#allocation2 + $0x8] sm:$0xff]
      %v131 = vld [vmem:[%s2] sm:$0x1]
      %v133 = vlaneseq
      %v134 = vshrl.u32 %v133, 7
      %v135 = vsub.s32 0, %v134
      %v136 = vrot.slane %v131, %v135
      %v138 = vadd.f32 %v129, %v136
      %v139 = vadd.f32 %v130, %v136
      %v140 = vpack.c.bf16 %v139, %v138
      %v142 = vunpack.c.l.b16 %v140
      %v143 = vunpack.c.h.b16 %v140
      %v144 = vpack.c.b16 %v142, %v142
      %v145 = vpack.c.b16 %v143, %v143
      %vm148 = vcmask 781312
      %149 = vst.msk [vmem:[#allocation8] sm:$0xf] %vm148, %v144
      %150 = vst.msk [vmem:[#allocation8 + $0x4] sm:$0xf] %vm148, %v145
    $region29: #{tpu_custom_call.1} parent=1 // pred_fallthru
      _
    // Predicated region
    $region30: #{tpu_custom_call.1} parent=1 // pred_check
      _
    $region31: #{tpu_custom_call.1} parent=1 // pred_check_branch
      %152 = sbr.rel (0) target = $region33
    $region32: #{tpu_custom_call.1} parent=1 // pred_region
      %s154 = ssub.s32 128, 128
      %155 = vsyncadd [#allocation5], %s154
      %s156 = sshll.u32 [#allocation8], 4
      %s157 = int_to_ptr.vmem [resolvable:$true] %s156
      %162 = dma.vmem_to_hbm [thread:$0]  %s157, 128, %s3, [#allocation5], 64, 64, 4
    $region33: #{tpu_custom_call.1} parent=1 // pred_fallthru
      _
    // Predicated region
    $region34: #{tpu_custom_call.1} parent=1 // pred_check
      _
    $region35: #{tpu_custom_call.1} parent=1 // pred_check_branch
      %164 = sbr.rel (0) target = $region37
    $region36: #{tpu_custom_call.1} parent=1 // pred_region
      %165 = dma.done [#allocation5], 128
    $region37: #{tpu_custom_call.1} parent=1 // pred_fallthru
      _
    %166 = vsyncpa [#allocation4], 1
    %167 = vsyncpa [#allocation7], 1
    %168 = vsyncpa [#allocation5], 1

</llo_original>
